<compile_context>
chip_gen: v7x
topology: tpu7x:2x2x1
jax: 0.10.0
libtpu: 0.0.40
codegen_flags: <defaults>
</compile_context>

<pallas_src>
import jax
import jax.numpy as jnp
from jax.experimental import pallas as pl
from jax.experimental.pallas import tpu as pltpu


def _channel_attention_kernel(x_ref, ones_ref, w1_ref, b1_ref, w2_ref, b2_ref,
                              o_ref):
    # x_ref: (TB, C, HW) block covering TB batch elements (native dtype).
    x = x_ref[...]
    tb, c, hw = x.shape
    sublane = 32 // x.dtype.itemsize        # 8 f32 / 16 bf16 / 32 int8

    # ---- AdaptiveAvgPool2d(1): reduce HW, accumulate in f32 ------------------
    if x.dtype.itemsize < 4 and c % sublane == 0:
        # Sub-32-bit input: MXU ones-vector reduction.  (TB, C, HW)->(TB*C, HW)
        # is a free view when C is a multiple of the sublane tile; the MXU
        # accumulates in f32 so no full-tile f32 copy of x is materialized.
        acc = jnp.dot(x.reshape(tb * c, hw), ones_ref[...],
                      preferred_element_type=jnp.float32)        # (TB*C, 1)
        avg = acc.reshape(tb, c) * (1.0 / hw)                    # (TB, C)
    else:
        # f32 input (cast is a no-op) or unaligned C: plain lane reduce.
        avg = jnp.sum(x.astype(jnp.float32), axis=-1) * (1.0 / hw)

    # ---- AdaptiveMaxPool2d(1): exact in the input dtype ----------------------
    if hw % 128 == 0 and hw > 128:
        # Elementwise vreg max across tile-aligned 128-lane chunks (VPU), then
        # a single cross-lane reduce (XLU) per 8-row group.
        m = x[:, :, 0:128]
        for j in range(1, hw // 128):
            m = jnp.maximum(m, x[:, :, j * 128:(j + 1) * 128])
        mx = jnp.max(m, axis=-1).astype(jnp.float32)             # (TB, C)
    else:
        mx = jnp.max(x, axis=-1).astype(jnp.float32)

    # ---- Shared MLP on both branches as one (2*TB, C) matmul pair ------------
    pooled = jnp.concatenate([avg, mx], axis=0)                  # (2*TB, C)

    h = jnp.dot(pooled, w1_ref[...],
                preferred_element_type=jnp.float32) + b1_ref[...]   # (2*TB, Cr)
    h = jnp.maximum(h, 0.0)

    out = jnp.dot(h, w2_ref[...],
                  preferred_element_type=jnp.float32) + b2_ref[...]  # (2*TB, C)

    # sigmoid(avg_branch + max_branch)
    o_ref[...] = jax.nn.sigmoid(out[:tb] + out[tb:]).astype(o_ref.dtype)


def channel_attention(x_nchw, w1_eff, b1_eff, w2_eff, b2_eff, *, tb=None,
                      x_vmem_budget_bytes=6 * 1024 * 1024):
    """x_nchw: (N, C, H, W).  Returns (N, C, 1, 1) attention weights."""
    N, C, H, W = x_nchw.shape
    HW = H * W
    C_red = w1_eff.shape[1]
    itemsize = jnp.dtype(x_nchw.dtype).itemsize
    sublane = max(8, 32 // itemsize)        # dtype-aware sublane packing tile

    # Batch TB elements per grid step, dtype-sublane aligned and never
    # degenerate; keep the double-buffered x block within a conservative
    # budget that is safe on v5e/v6e/v7x alike.
    if tb is None:
        per_batch_bytes = C * HW * itemsize
        tb = int(x_vmem_budget_bytes // (2 * per_batch_bytes))
        tb = max(sublane, (tb // sublane) * sublane)
        # v7x megacore: keep >= 2 parallel grid steps when the batch allows it.
        if N >= 2 * sublane:
            half = -(-N // 2)
            half = (-(-half // sublane)) * sublane
            tb = min(tb, half)
        tb = min(tb, N)
        if tb < N and tb % sublane != 0:     # safety net (should be unreachable)
            tb = N
    n_steps = pl.cdiv(N, tb)

    # No jnp.pad: the reshape below is a free metadata view, and the last
    # (possibly partial) batch block is handled by Pallas — garbage rows only
    # feed garbage output rows, which are masked on store.
    x_flat = x_nchw.reshape(N, C, HW)

    ones_hw = jnp.ones((HW, 1), x_nchw.dtype)           # MXU avg-pool RHS
    w1 = w1_eff.astype(jnp.float32)
    w2 = w2_eff.astype(jnp.float32)
    b1 = b1_eff.reshape(1, C_red).astype(jnp.float32)
    b2 = b2_eff.reshape(1, C).astype(jnp.float32)

    # Explicit VMEM limit: double-buffered x + out, resident weights/ones,
    # one extra x-block worth of in-kernel temporaries, plus headroom.
    x_block_bytes = tb * C * HW * itemsize
    out_block_bytes = tb * C * itemsize
    w_bytes = 4 * (C * C_red + C_red + C_red * C + C)
    ones_bytes = HW * itemsize
    vmem_limit = int(3 * x_block_bytes + 2 * out_block_bytes + 2 * w_bytes
                     + ones_bytes + (8 << 20))

    out = pl.pallas_call(
        _channel_attention_kernel,
        out_shape=jax.ShapeDtypeStruct((N, C), x_nchw.dtype),
        grid_spec=pltpu.PrefetchScalarGridSpec(
            num_scalar_prefetch=0,
            grid=(n_steps,),
            in_specs=[
                pl.BlockSpec((tb, C, HW), lambda n: (n, 0, 0)),   # x: per-step DMA
                pl.BlockSpec((HW, 1), lambda n: (0, 0)),          # ones: resident
                pl.BlockSpec((C, C_red), lambda n: (0, 0)),       # W1: resident
                pl.BlockSpec((1, C_red), lambda n: (0, 0)),       # b1
                pl.BlockSpec((C_red, C), lambda n: (0, 0)),       # W2
                pl.BlockSpec((1, C), lambda n: (0, 0)),           # b2
            ],
            out_specs=pl.BlockSpec((tb, C), lambda n: (n, 0)),
        ),
        compiler_params=pltpu.CompilerParams(
            dimension_semantics=("parallel",),
            vmem_limit_bytes=vmem_limit),
    )(x_flat, ones_hw, w1, b1, w2, b2)

    return out.reshape(N, C, 1, 1)


def _init_repvgg_block_params(key, c_in, c_out):
    """Deterministic params for OnlyConvRepVGGBlock(c_in, c_out, 3, padding=1):
    a 3x3 conv branch + a 1x1 conv branch, each with bias."""
    k3w, k3b, k1w, k1b = jax.random.split(key, 4)
    w3 = jax.random.normal(k3w, (c_out, c_in, 3, 3), jnp.float32) * 0.05
    b3 = jax.random.normal(k3b, (c_out,), jnp.float32) * 0.05
    w1 = jax.random.normal(k1w, (c_out, c_in, 1, 1), jnp.float32) * 0.05
    b1 = jax.random.normal(k1b, (c_out,), jnp.float32) * 0.05
    return w3, b3, w1, b1


def _collapse_block(w3, b3, w1, b1):
    """On a 1x1 spatial input with padding=1, the block is exactly a linear
    layer: W_eff (C_in, C_out) for right-multiplication, b_eff (C_out,)."""
    w_eff = (w3[:, :, 1, 1] + w1[:, :, 0, 0]).T   # (C_in, C_out)
    b_eff = b3 + b1
    return w_eff, b_eff


def _reference(x, w1_eff, b1_eff, w2_eff, b2_eff):
    """Plain-JAX reference for verification."""
    xf = x.astype(jnp.float32)
    avg = jnp.mean(xf, axis=(2, 3))                     # (N, C)
    mx = jnp.max(xf, axis=(2, 3))                       # (N, C)

    def branch(p):
        h = jnp.maximum(p @ w1_eff + b1_eff, 0.0)
        return h @ w2_eff + b2_eff

    out = jax.nn.sigmoid(branch(avg) + branch(mx))
    return out.reshape(*out.shape, 1, 1)


if __name__ == "__main__":
    key = jax.random.PRNGKey(0)
    kx, kf1, kf2 = jax.random.split(key, 3)

    # in_planes must be >= 16 (module hardcodes in_planes // 16).
    N, C, H, W = 2, 64, 16, 16
    C_red = C // 16

    x = jax.random.normal(kx, (N, C, H, W), jnp.float32)

    # fc1: C -> C//16,  fc2: C//16 -> C
    w3_1, b3_1, w1_1, b1_1 = _init_repvgg_block_params(kf1, C, C_red)
    w3_2, b3_2, w1_2, b1_2 = _init_repvgg_block_params(kf2, C_red, C)
    w1_eff, b1_eff = _collapse_block(w3_1, b3_1, w1_1, b1_1)   # (C, C_red), (C_red,)
    w2_eff, b2_eff = _collapse_block(w3_2, b3_2, w1_2, b1_2)   # (C_red, C), (C,)

    # f32 path (exact avg/max pooling, tight tolerance).
    out = channel_attention(x, w1_eff, b1_eff, w2_eff, b2_eff)
    out = jax.block_until_ready(out)
    ref = _reference(x, w1_eff, b1_eff, w2_eff, b2_eff)
    assert out.shape == (N, C, 1, 1)
    assert jnp.allclose(out, ref, atol=1e-5, rtol=1e-5)

    # bf16 path (exercises the MXU avg-pool reduction and 16-row sublane
    # alignment; looser tolerance for the bf16 output dtype).
    x_bf16 = x.astype(jnp.bfloat16)
    out_bf = channel_attention(x_bf16, w1_eff, b1_eff, w2_eff, b2_eff)
    out_bf = jax.block_until_ready(out_bf)
    ref_bf = _reference(x_bf16, w1_eff, b1_eff, w2_eff, b2_eff)
    assert out_bf.shape == (N, C, 1, 1)
    assert jnp.allclose(out_bf.astype(jnp.float32), ref_bf, atol=2e-2, rtol=2e-2)

    print("KERNEL_OK")
</pallas_src>

<mosaic_0001>
module attributes {stable_mosaic.version = 11 : i64} {
  func.func @_channel_attention_kernel(%arg0: i32, %arg1: memref<2x64x256xf32, #tpu.memory_space<vmem>>, %arg2: memref<256x1xf32, #tpu.memory_space<vmem>>, %arg3: memref<64x4xf32, #tpu.memory_space<vmem>>, %arg4: memref<1x4xf32, #tpu.memory_space<vmem>>, %arg5: memref<4x64xf32, #tpu.memory_space<vmem>>, %arg6: memref<1x64xf32, #tpu.memory_space<vmem>>, %arg7: memref<2x64xf32, #tpu.memory_space<vmem>>) attributes {dimension_semantics = [#tpu.dimension_semantics<parallel>], iteration_bounds = array<i64: 1>, scalar_prefetch = 0 : i64, scratch_operands = 0 : i64, tpu.core_type = #tpu.core_type<tc>, window_params = [{transform_indices = @transform_0, window_bounds = array<i64: 2, 64, 256>}, {pipeline_mode = #tpu.pipeline_mode<synchronous>, transform_indices = @transform_1, window_bounds = array<i64: 256, 1>}, {pipeline_mode = #tpu.pipeline_mode<synchronous>, transform_indices = @transform_2, window_bounds = array<i64: 64, 4>}, {pipeline_mode = #tpu.pipeline_mode<synchronous>, transform_indices = @transform_3, window_bounds = array<i64: 1, 4>}, {pipeline_mode = #tpu.pipeline_mode<synchronous>, transform_indices = @transform_4, window_bounds = array<i64: 4, 64>}, {pipeline_mode = #tpu.pipeline_mode<synchronous>, transform_indices = @transform_5, window_bounds = array<i64: 1, 64>}, {transform_indices = @transform_6, window_bounds = array<i64: 2, 64>}]} {
    %c0 = arith.constant 0 : index
    %c0_0 = arith.constant 0 : index
    %c0_1 = arith.constant 0 : index
    %0 = vector.load %arg1[%c0, %c0_0, %c0_1] : memref<2x64x256xf32, #tpu.memory_space<vmem>>, vector<2x64x256xf32>
    %cst = arith.constant dense<0.000000e+00> : vector<2x64xf32>
    %1 = vector.multi_reduction <add>, %0, %cst [2] : vector<2x64x256xf32> to vector<2x64xf32>
    %cst_2 = arith.constant 3.906250e-03 : f32
    %2 = vector.broadcast %cst_2 : f32 to vector<2x64xf32>
    %3 = arith.mulf %1, %2 : vector<2x64xf32>
    %4 = vector.extract_strided_slice %0 {offsets = [0, 0, 0], sizes = [2, 64, 128], strides = [1, 1, 1]} : vector<2x64x256xf32> to vector<2x64x128xf32>
    %5 = vector.extract_strided_slice %0 {offsets = [0, 0, 128], sizes = [2, 64, 128], strides = [1, 1, 1]} : vector<2x64x256xf32> to vector<2x64x128xf32>
    %6 = arith.maximumf %4, %5 : vector<2x64x128xf32>
    %cst_3 = arith.constant dense<0xFF800000> : vector<2x64xf32>
    %7 = vector.multi_reduction <maximumf>, %6, %cst_3 [2] : vector<2x64x128xf32> to vector<2x64xf32>
    %8 = tpu.concatenate %3, %7 in 0 : vector<2x64xf32>, vector<2x64xf32> -> vector<4x64xf32>
    %c0_4 = arith.constant 0 : index
    %c0_5 = arith.constant 0 : index
    %9 = vector.load %arg3[%c0_4, %c0_5] : memref<64x4xf32, #tpu.memory_space<vmem>>, vector<64x4xf32>
    %cst_6 = arith.constant dense<0.000000e+00> : vector<4x4xf32>
    %10 = tpu.matmul %8, %9, %cst_6 {dimension_numbers = #tpu.dot_dimension_numbers<[1], [0], [0], [1], [0, 0, 1, 1], [], []>} : vector<4x64xf32>, vector<64x4xf32>, vector<4x4xf32> -> vector<4x4xf32>
    %c0_7 = arith.constant 0 : index
    %c0_8 = arith.constant 0 : index
    %11 = vector.load %arg4[%c0_7, %c0_8] : memref<1x4xf32, #tpu.memory_space<vmem>>, vector<1x4xf32>
    %12 = vector.broadcast %11 : vector<1x4xf32> to vector<4x4xf32>
    %13 = arith.addf %10, %12 : vector<4x4xf32>
    %cst_9 = arith.constant 0.000000e+00 : f32
    %14 = vector.broadcast %cst_9 : f32 to vector<4x4xf32>
    %15 = arith.maximumf %13, %14 : vector<4x4xf32>
    %c0_10 = arith.constant 0 : index
    %c0_11 = arith.constant 0 : index
    %16 = vector.load %arg5[%c0_10, %c0_11] : memref<4x64xf32, #tpu.memory_space<vmem>>, vector<4x64xf32>
    %cst_12 = arith.constant dense<0.000000e+00> : vector<4x64xf32>
    %17 = tpu.matmul %15, %16, %cst_12 {dimension_numbers = #tpu.dot_dimension_numbers<[1], [0], [0], [1], [0, 0, 1, 1], [], []>} : vector<4x4xf32>, vector<4x64xf32>, vector<4x64xf32> -> vector<4x64xf32>
    %c0_13 = arith.constant 0 : index
    %c0_14 = arith.constant 0 : index
    %18 = vector.load %arg6[%c0_13, %c0_14] : memref<1x64xf32, #tpu.memory_space<vmem>>, vector<1x64xf32>
    %19 = vector.broadcast %18 : vector<1x64xf32> to vector<4x64xf32>
    %20 = arith.addf %17, %19 : vector<4x64xf32>
    %21 = vector.extract_strided_slice %20 {offsets = [0, 0], sizes = [2, 64], strides = [1, 1]} : vector<4x64xf32> to vector<2x64xf32>
    %22 = vector.extract_strided_slice %20 {offsets = [2, 0], sizes = [2, 64], strides = [1, 1]} : vector<4x64xf32> to vector<2x64xf32>
    %23 = arith.addf %21, %22 : vector<2x64xf32>
    %24 = arith.negf %23 : vector<2x64xf32>
    %25 = math.exp %24 : vector<2x64xf32>
    %cst_15 = arith.constant 1.000000e+00 : f32
    %26 = vector.broadcast %cst_15 : f32 to vector<2x64xf32>
    %27 = arith.addf %26, %25 : vector<2x64xf32>
    %28 = arith.divf %26, %27 : vector<2x64xf32>
    %c0_16 = arith.constant 0 : index
    %c0_17 = arith.constant 0 : index
    %29 = vector.load %arg7[%c0_16, %c0_17] : memref<2x64xf32, #tpu.memory_space<vmem>>, vector<2x64xf32>
    tpu.vector_store %arg7[%c0_16, %c0_17], %28 {strides = array<i32>} : memref<2x64xf32, #tpu.memory_space<vmem>>, vector<2x64xf32>,
    return
  }
  func.func @transform_0(%arg0: i32) -> (i32, i32, i32) {
    %c0_i32 = arith.constant 0 : i32
    %c0_i32_0 = arith.constant 0 : i32
    %c0_i32_1 = arith.constant 0 : i32
    return %arg0, %c0_i32, %c0_i32_0 : i32, i32, i32
  }
  func.func @transform_1(%arg0: i32) -> (i32, i32) {
    %c0_i32 = arith.constant 0 : i32
    %c0_i32_0 = arith.constant 0 : i32
    %c0_i32_1 = arith.constant 0 : i32
    return %c0_i32, %c0_i32_0 : i32, i32
  }
  func.func @transform_2(%arg0: i32) -> (i32, i32) {
    %c0_i32 = arith.constant 0 : i32
    %c0_i32_0 = arith.constant 0 : i32
    %c0_i32_1 = arith.constant 0 : i32
    return %c0_i32, %c0_i32_0 : i32, i32
  }
  func.func @transform_3(%arg0: i32) -> (i32, i32) {
    %c0_i32 = arith.constant 0 : i32
    %c0_i32_0 = arith.constant 0 : i32
    %c0_i32_1 = arith.constant 0 : i32
    return %c0_i32, %c0_i32_0 : i32, i32
  }
  func.func @transform_4(%arg0: i32) -> (i32, i32) {
    %c0_i32 = arith.constant 0 : i32
    %c0_i32_0 = arith.constant 0 : i32
    %c0_i32_1 = arith.constant 0 : i32
    return %c0_i32, %c0_i32_0 : i32, i32
  }
  func.func @transform_5(%arg0: i32) -> (i32, i32) {
    %c0_i32 = arith.constant 0 : i32
    %c0_i32_0 = arith.constant 0 : i32
    %c0_i32_1 = arith.constant 0 : i32
    return %c0_i32, %c0_i32_0 : i32, i32
  }
  func.func @transform_6(%arg0: i32) -> (i32, i32) {
    %c0_i32 = arith.constant 0 : i32
    %c0_i32_0 = arith.constant 0 : i32
    return %arg0, %c0_i32 : i32, i32
  }
}

</mosaic_0001>

<llo_original>
// kernel: tpu_custom_call.1
$region0: #{tpu_custom_call.1}
  #allocation0 [shape = 'u32[]', space=smem, size = 0x4, offset = 0x4, fixed_abs, tag = 'smem constant byte address 0x4 - core index']
  #allocation1 [shape = 'u32[144,128]{1,0:T(1,128)}', space=vmem, size = 0x12000, scoped, tag = 'internal scratch']
  %s0 = inlined_call_operand.vmem [shape: f32[2,64,256], index: 0, kind: input, shape index: {}]
  %s1 = inlined_call_operand.vmem [shape: f32[256,1], index: 1, kind: input, shape index: {}]
  %s2 = inlined_call_operand.vmem [shape: f32[64,4], index: 2, kind: input, shape index: {}]
  %s3 = inlined_call_operand.vmem [shape: f32[1,4], index: 3, kind: input, shape index: {}]
  %s4 = inlined_call_operand.vmem [shape: f32[4,64], index: 4, kind: input, shape index: {}]
  %s5 = inlined_call_operand.vmem [shape: f32[1,64], index: 5, kind: input, shape index: {}]
  %s6 = inlined_call_operand.hbm [shape: f32[2,64], index: 6, kind: output, shape index: {}]
  %s7 = sld [smem:[#allocation0]]
  $region34: #{tpu_custom_call.1} parent=0
    _
  %s9 = ssub.s32 1, %s7
  %s10 = scalar_select 0, %s9, %s7
  $region1: #{tpu_custom_call.1} parent=0
    #allocation2 [shape = 'u8[1024]{0}', space=vmem, size = 0x400, scoped, tag = 'output window, operand 0, single buffered']
    #allocation3 [shape = 's32[1]{0}', space=sflag, size = 0x4, scoped, tag = 'scoped memory for tpu_custom_call.1']
    %11 = vsyncpa [#allocation3], 0
    // Predicated region
    $region2: #{tpu_custom_call.1} parent=1 // pred_check
      _
    $region3: #{tpu_custom_call.1} parent=1 // pred_check_branch
      %13 = sbr.rel (0) target = $region5
    $region4: #{tpu_custom_call.1} parent=1 // pred_region
      _
    $region5: #{tpu_custom_call.1} parent=1 // pred_fallthru
      _
    // Predicated region
    $region6: #{tpu_custom_call.1} parent=1 // pred_check
      _
    $region7: #{tpu_custom_call.1} parent=1 // pred_check_branch
      %15 = sbr.rel (0) target = $region9
    $region8: #{tpu_custom_call.1} parent=1 // pred_region
      _
    $region9: #{tpu_custom_call.1} parent=1 // pred_fallthru
      _
    // Predicated region
    $region10: #{tpu_custom_call.1} parent=1 // pred_check
      _
    $region11: #{tpu_custom_call.1} parent=1 // pred_check_branch
      %17 = sbr.rel (0) target = $region13
    $region12: #{tpu_custom_call.1} parent=1 // pred_region
      _
    $region13: #{tpu_custom_call.1} parent=1 // pred_fallthru
      _
    // Predicated region
    $region14: #{tpu_custom_call.1} parent=1 // pred_check
      _
    $region15: #{tpu_custom_call.1} parent=1 // pred_check_branch
      %19 = sbr.rel (0) target = $region17
    $region16: #{tpu_custom_call.1} parent=1 // pred_region
      _
    $region17: #{tpu_custom_call.1} parent=1 // pred_fallthru
      _
    // Predicated region
    $region18: #{tpu_custom_call.1} parent=1 // pred_check
      _
    $region19: #{tpu_custom_call.1} parent=1 // pred_check_branch
      %21 = sbr.rel (0) target = $region21
    $region20: #{tpu_custom_call.1} parent=1 // pred_region
      _
    $region21: #{tpu_custom_call.1} parent=1 // pred_fallthru
      _
    // Predicated region
    $region22: #{tpu_custom_call.1} parent=1 // pred_check
      _
    $region23: #{tpu_custom_call.1} parent=1 // pred_check_branch
      %23 = sbr.rel (0) target = $region25
    $region24: #{tpu_custom_call.1} parent=1 // pred_region
      _
    $region25: #{tpu_custom_call.1} parent=1 // pred_fallthru
      _
    %v24 = vld [vmem:[%s0] sm:$0xff]
    %v25 = vld [vmem:[%s0 + $0x8] sm:$0xff]
    %v26 = vld [vmem:[%s0 + $0x10] sm:$0xff]
    %v27 = vld [vmem:[%s0 + $0x18] sm:$0xff]
    %v28 = vld [vmem:[%s0 + $0x20] sm:$0xff]
    %v29 = vld [vmem:[%s0 + $0x28] sm:$0xff]
    %v30 = vld [vmem:[%s0 + $0x30] sm:$0xff]
    %v31 = vld [vmem:[%s0 + $0x38] sm:$0xff]
    %v32 = vld [vmem:[%s0 + $0x40] sm:$0xff]
    %v33 = vld [vmem:[%s0 + $0x48] sm:$0xff]
    %v34 = vld [vmem:[%s0 + $0x50] sm:$0xff]
    %v35 = vld [vmem:[%s0 + $0x58] sm:$0xff]
    %v36 = vld [vmem:[%s0 + $0x60] sm:$0xff]
    %v37 = vld [vmem:[%s0 + $0x68] sm:$0xff]
    %v38 = vld [vmem:[%s0 + $0x70] sm:$0xff]
    %v39 = vld [vmem:[%s0 + $0x78] sm:$0xff]
    %v40 = vld [vmem:[%s0 + $0x80] sm:$0xff]
    %v41 = vld [vmem:[%s0 + $0x88] sm:$0xff]
    %v42 = vld [vmem:[%s0 + $0x90] sm:$0xff]
    %v43 = vld [vmem:[%s0 + $0x98] sm:$0xff]
    %v44 = vld [vmem:[%s0 + $0xa0] sm:$0xff]
    %v45 = vld [vmem:[%s0 + $0xa8] sm:$0xff]
    %v46 = vld [vmem:[%s0 + $0xb0] sm:$0xff]
    %v47 = vld [vmem:[%s0 + $0xb8] sm:$0xff]
    %v48 = vld [vmem:[%s0 + $0xc0] sm:$0xff]
    %v49 = vld [vmem:[%s0 + $0xc8] sm:$0xff]
    %v50 = vld [vmem:[%s0 + $0xd0] sm:$0xff]
    %v51 = vld [vmem:[%s0 + $0xd8] sm:$0xff]
    %v52 = vld [vmem:[%s0 + $0xe0] sm:$0xff]
    %v53 = vld [vmem:[%s0 + $0xe8] sm:$0xff]
    %v54 = vld [vmem:[%s0 + $0xf0] sm:$0xff]
    %v55 = vld [vmem:[%s0 + $0xf8] sm:$0xff]
    %v56 = vadd.f32 %v24, %v25
    %57 = vadd.xlane.f32.xlu0 %v56
    %v58 = vpop.xlane.xlu0 %57
    %v59 = vadd.f32 %v26, %v27
    %60 = vadd.xlane.f32.xlu0 %v59
    %v61 = vpop.xlane.xlu0 %60
    %v62 = vadd.f32 %v28, %v29
    %63 = vadd.xlane.f32.xlu0 %v62
    %v64 = vpop.xlane.xlu0 %63
    %v65 = vadd.f32 %v30, %v31
    %66 = vadd.xlane.f32.xlu0 %v65
    %v67 = vpop.xlane.xlu0 %66
    %v68 = vadd.f32 %v32, %v33
    %69 = vadd.xlane.f32.xlu0 %v68
    %v70 = vpop.xlane.xlu0 %69
    %v71 = vadd.f32 %v34, %v35
    %72 = vadd.xlane.f32.xlu0 %v71
    %v73 = vpop.xlane.xlu0 %72
    %v74 = vadd.f32 %v36, %v37
    %75 = vadd.xlane.f32.xlu0 %v74
    %v76 = vpop.xlane.xlu0 %75
    %v77 = vadd.f32 %v38, %v39
    %78 = vadd.xlane.f32.xlu0 %v77
    %v79 = vpop.xlane.xlu0 %78
    %v80 = vadd.f32 %v40, %v41
    %81 = vadd.xlane.f32.xlu0 %v80
    %v82 = vpop.xlane.xlu0 %81
    %v83 = vadd.f32 %v42, %v43
    %84 = vadd.xlane.f32.xlu0 %v83
    %v85 = vpop.xlane.xlu0 %84
    %v86 = vadd.f32 %v44, %v45
    %87 = vadd.xlane.f32.xlu0 %v86
    %v88 = vpop.xlane.xlu0 %87
    %v89 = vadd.f32 %v46, %v47
    %90 = vadd.xlane.f32.xlu0 %v89
    %v91 = vpop.xlane.xlu0 %90
    %v92 = vadd.f32 %v48, %v49
    %93 = vadd.xlane.f32.xlu0 %v92
    %v94 = vpop.xlane.xlu0 %93
    %v95 = vadd.f32 %v50, %v51
    %96 = vadd.xlane.f32.xlu0 %v95
    %v97 = vpop.xlane.xlu0 %96
    %v98 = vadd.f32 %v52, %v53
    %99 = vadd.xlane.f32.xlu0 %v98
    %v100 = vpop.xlane.xlu0 %99
    %v101 = vadd.f32 %v54, %v55
    %102 = vadd.xlane.f32.xlu0 %v101
    %v103 = vpop.xlane.xlu0 %102
    %v104 = vmul.f32 %v58, 0.00390625
    %v105 = vmul.f32 %v61, 0.00390625
    %v106 = vmul.f32 %v64, 0.00390625
    %v107 = vmul.f32 %v67, 0.00390625
    %v108 = vmul.f32 %v70, 0.00390625
    %v109 = vmul.f32 %v73, 0.00390625
    %v110 = vmul.f32 %v76, 0.00390625
    %v111 = vmul.f32 %v79, 0.00390625
    %v112 = vmul.f32 %v82, 0.00390625
    %v113 = vmul.f32 %v85, 0.00390625
    %v114 = vmul.f32 %v88, 0.00390625
    %v115 = vmul.f32 %v91, 0.00390625
    %v116 = vmul.f32 %v94, 0.00390625
    %v117 = vmul.f32 %v97, 0.00390625
    %v118 = vmul.f32 %v100, 0.00390625
    %v119 = vmul.f32 %v103, 0.00390625
    %v120 = vmax.f32 %v24, %v25
    %v121 = vmax.f32 %v26, %v27
    %v122 = vmax.f32 %v28, %v29
    %v123 = vmax.f32 %v30, %v31
    %v124 = vmax.f32 %v32, %v33
    %v125 = vmax.f32 %v34, %v35
    %v126 = vmax.f32 %v36, %v37
    %v127 = vmax.f32 %v38, %v39
    %v128 = vmax.f32 %v40, %v41
    %v129 = vmax.f32 %v42, %v43
    %v130 = vmax.f32 %v44, %v45
    %v131 = vmax.f32 %v46, %v47
    %v132 = vmax.f32 %v48, %v49
    %v133 = vmax.f32 %v50, %v51
    %v134 = vmax.f32 %v52, %v53
    %v135 = vmax.f32 %v54, %v55
    %136 = vmax.xlane.f32.xlu0 %v120
    %v137 = vpop.xlane.xlu0 %136
    %138 = vmax.xlane.f32.xlu0 %v121
    %v139 = vpop.xlane.xlu0 %138
    %140 = vmax.xlane.f32.xlu0 %v122
    %v141 = vpop.xlane.xlu0 %140
    %142 = vmax.xlane.f32.xlu0 %v123
    %v143 = vpop.xlane.xlu0 %142
    %144 = vmax.xlane.f32.xlu0 %v124
    %v145 = vpop.xlane.xlu0 %144
    %146 = vmax.xlane.f32.xlu0 %v125
    %v147 = vpop.xlane.xlu0 %146
    %148 = vmax.xlane.f32.xlu0 %v126
    %v149 = vpop.xlane.xlu0 %148
    %150 = vmax.xlane.f32.xlu0 %v127
    %v151 = vpop.xlane.xlu0 %150
    %152 = vmax.xlane.f32.xlu0 %v128
    %v153 = vpop.xlane.xlu0 %152
    %154 = vmax.xlane.f32.xlu0 %v129
    %v155 = vpop.xlane.xlu0 %154
    %156 = vmax.xlane.f32.xlu0 %v130
    %v157 = vpop.xlane.xlu0 %156
    %158 = vmax.xlane.f32.xlu0 %v131
    %v159 = vpop.xlane.xlu0 %158
    %160 = vmax.xlane.f32.xlu0 %v132
    %v161 = vpop.xlane.xlu0 %160
    %162 = vmax.xlane.f32.xlu0 %v133
    %v163 = vpop.xlane.xlu0 %162
    %164 = vmax.xlane.f32.xlu0 %v134
    %v165 = vpop.xlane.xlu0 %164
    %166 = vmax.xlane.f32.xlu0 %v135
    %v167 = vpop.xlane.xlu0 %166
    %v184 = vlaneseq
    %v185 = vand.u32 %v184, 127
    %v186 = vlaneseq
    %v187 = vshrl.u32 %v186, 7
    %v188 = vsub.s32 %v185, %v187
    %v189 = vrot.slane %v104, %v188
    %v190 = vadd.s32 %v185, 4294967288
    %v191 = vlaneseq
    %v192 = vshrl.u32 %v191, 7
    %v193 = vsub.s32 %v190, %v192
    %v194 = vrot.slane %v105, %v193
    %vm195 = vcmask 130112
    %v196 = vsel %vm195, %v194, %v189
    %v197 = vadd.s32 %v185, 4294967280
    %v198 = vlaneseq
    %v199 = vshrl.u32 %v198, 7
    %v200 = vsub.s32 %v197, %v199
    %v201 = vrot.slane %v106, %v200
    %vm202 = vcmask 195712
    %v203 = vsel %vm202, %v201, %v196
    %v204 = vadd.s32 %v185, 4294967272
    %v205 = vlaneseq
    %v206 = vshrl.u32 %v205, 7
    %v207 = vsub.s32 %v204, %v206
    %v208 = vrot.slane %v107, %v207
    %vm209 = vcmask 261312
    %v210 = vsel %vm209, %v208, %v203
    %v211 = vadd.s32 %v185, 4294967264
    %v212 = vlaneseq
    %v213 = vshrl.u32 %v212, 7
    %v214 = vsub.s32 %v211, %v213
    %v215 = vrot.slane %v108, %v214
    %vm216 = vcmask 326912
    %v217 = vsel %vm216, %v215, %v210
    %v218 = vadd.s32 %v185, 4294967256
    %v219 = vlaneseq
    %v220 = vshrl.u32 %v219, 7
    %v221 = vsub.s32 %v218, %v220
    %v222 = vrot.slane %v109, %v221
    %vm223 = vcmask 392512
    %v224 = vsel %vm223, %v222, %v217
    %v225 = vadd.s32 %v185, 4294967248
    %v226 = vlaneseq
    %v227 = vshrl.u32 %v226, 7
    %v228 = vsub.s32 %v225, %v227
    %v229 = vrot.slane %v110, %v228
    %vm230 = vcmask 458112
    %v231 = vsel %vm230, %v229, %v224
    %v232 = vadd.s32 %v185, 4294967240
    %v233 = vlaneseq
    %v234 = vshrl.u32 %v233, 7
    %v235 = vsub.s32 %v232, %v234
    %v236 = vrot.slane %v111, %v235
    %vm237 = vcmask 523712
    %v238 = vsel %vm237, %v236, %v231
    %v239 = vlaneseq
    %v240 = vshrl.u32 %v239, 7
    %v241 = vsub.s32 %v185, %v240
    %v242 = vrot.slane %v112, %v241
    %v243 = vlaneseq
    %v244 = vshrl.u32 %v243, 7
    %v245 = vsub.s32 %v190, %v244
    %v246 = vrot.slane %v113, %v245
    %v247 = vsel %vm195, %v246, %v242
    %v248 = vlaneseq
    %v249 = vshrl.u32 %v248, 7
    %v250 = vsub.s32 %v197, %v249
    %v251 = vrot.slane %v114, %v250
    %v252 = vsel %vm202, %v251, %v247
    %v253 = vlaneseq
    %v254 = vshrl.u32 %v253, 7
    %v255 = vsub.s32 %v204, %v254
    %v256 = vrot.slane %v115, %v255
    %v257 = vsel %vm209, %v256, %v252
    %v258 = vlaneseq
    %v259 = vshrl.u32 %v258, 7
    %v260 = vsub.s32 %v211, %v259
    %v261 = vrot.slane %v116, %v260
    %v262 = vsel %vm216, %v261, %v257
    %v263 = vlaneseq
    %v264 = vshrl.u32 %v263, 7
    %v265 = vsub.s32 %v218, %v264
    %v266 = vrot.slane %v117, %v265
    %v267 = vsel %vm223, %v266, %v262
    %v268 = vlaneseq
    %v269 = vshrl.u32 %v268, 7
    %v270 = vsub.s32 %v225, %v269
    %v271 = vrot.slane %v118, %v270
    %v272 = vsel %vm230, %v271, %v267
    %v273 = vlaneseq
    %v274 = vshrl.u32 %v273, 7
    %v275 = vsub.s32 %v232, %v274
    %v276 = vrot.slane %v119, %v275
    %v277 = vsel %vm237, %v276, %v272
    %vm278 = vcmask 1041409
    %v279 = vsel %vm278, %v277, %v238
    %v297 = vlaneseq
    %v298 = vshrl.u32 %v297, 7
    %v299 = vsub.s32 %v185, %v298
    %v300 = vrot.slane %v137, %v299
    %v301 = vlaneseq
    %v302 = vshrl.u32 %v301, 7
    %v303 = vsub.s32 %v190, %v302
    %v304 = vrot.slane %v139, %v303
    %v305 = vsel %vm195, %v304, %v300
    %v306 = vlaneseq
    %v307 = vshrl.u32 %v306, 7
    %v308 = vsub.s32 %v197, %v307
    %v309 = vrot.slane %v141, %v308
    %v310 = vsel %vm202, %v309, %v305
    %v311 = vlaneseq
    %v312 = vshrl.u32 %v311, 7
    %v313 = vsub.s32 %v204, %v312
    %v314 = vrot.slane %v143, %v313
    %v315 = vsel %vm209, %v314, %v310
    %v316 = vlaneseq
    %v317 = vshrl.u32 %v316, 7
    %v318 = vsub.s32 %v211, %v317
    %v319 = vrot.slane %v145, %v318
    %v320 = vsel %vm216, %v319, %v315
    %v321 = vlaneseq
    %v322 = vshrl.u32 %v321, 7
    %v323 = vsub.s32 %v218, %v322
    %v324 = vrot.slane %v147, %v323
    %v325 = vsel %vm223, %v324, %v320
    %v326 = vlaneseq
    %v327 = vshrl.u32 %v326, 7
    %v328 = vsub.s32 %v225, %v327
    %v329 = vrot.slane %v149, %v328
    %v330 = vsel %vm230, %v329, %v325
    %v331 = vlaneseq
    %v332 = vshrl.u32 %v331, 7
    %v333 = vsub.s32 %v232, %v332
    %v334 = vrot.slane %v151, %v333
    %v335 = vsel %vm237, %v334, %v330
    %v336 = vlaneseq
    %v337 = vshrl.u32 %v336, 7
    %v338 = vsub.s32 %v185, %v337
    %v339 = vrot.slane %v153, %v338
    %v340 = vlaneseq
    %v341 = vshrl.u32 %v340, 7
    %v342 = vsub.s32 %v190, %v341
    %v343 = vrot.slane %v155, %v342
    %v344 = vsel %vm195, %v343, %v339
    %v345 = vlaneseq
    %v346 = vshrl.u32 %v345, 7
    %v347 = vsub.s32 %v197, %v346
    %v348 = vrot.slane %v157, %v347
    %v349 = vsel %vm202, %v348, %v344
    %v350 = vlaneseq
    %v351 = vshrl.u32 %v350, 7
    %v352 = vsub.s32 %v204, %v351
    %v353 = vrot.slane %v159, %v352
    %v354 = vsel %vm209, %v353, %v349
    %v355 = vlaneseq
    %v356 = vshrl.u32 %v355, 7
    %v357 = vsub.s32 %v211, %v356
    %v358 = vrot.slane %v161, %v357
    %v359 = vsel %vm216, %v358, %v354
    %v360 = vlaneseq
    %v361 = vshrl.u32 %v360, 7
    %v362 = vsub.s32 %v218, %v361
    %v363 = vrot.slane %v163, %v362
    %v364 = vsel %vm223, %v363, %v359
    %v365 = vlaneseq
    %v366 = vshrl.u32 %v365, 7
    %v367 = vsub.s32 %v225, %v366
    %v368 = vrot.slane %v165, %v367
    %v369 = vsel %vm230, %v368, %v364
    %v370 = vlaneseq
    %v371 = vshrl.u32 %v370, 7
    %v372 = vsub.s32 %v232, %v371
    %v373 = vrot.slane %v167, %v372
    %v374 = vsel %vm237, %v373, %v369
    %vm375 = vcmask 1043459
    %v376 = vsel %vm375, %v374, %v335
    %vm378 = vcmask 1041408
    %v379 = vsel %vm378, %v279, %v376
    %v380 = vld [vmem:[%s2] sm:$0xff]
    %v381 = vld [vmem:[%s2 + $0x8] sm:$0xff]
    %v382 = vld [vmem:[%s2 + $0x10] sm:$0xff]
    %v383 = vld [vmem:[%s2 + $0x18] sm:$0xff]
    %v384 = vld [vmem:[%s2 + $0x20] sm:$0xff]
    %v385 = vld [vmem:[%s2 + $0x28] sm:$0xff]
    %v386 = vld [vmem:[%s2 + $0x30] sm:$0xff]
    %v387 = vld [vmem:[%s2 + $0x38] sm:$0xff]
    %v388 = vld [vmem:[%s3] sm:$0x1]
    %v390 = vlaneseq
    %v391 = vshrl.u32 %v390, 7
    %v392 = vsub.s32 0, %v391
    %v393 = vrot.slane %v388, %v392
    %vm395 = vcmask 523264
    %v397 = vsel %vm395, %v379, 0
    %399 = vmatprep.subr.mxu0 0.0
    %400 = vmatpush1.msra.mxu0 %v380
    %401 = vmatprep.subr.mxu0 0.0
    %402 = vmatpush1.msra.mxu0 %v381
    %403 = vmatprep.subr.mxu0 0.0
    %404 = vmatpush1.msra.mxu0 %v382
    %405 = vmatprep.subr.mxu0 0.0
    %406 = vmatpush1.msra.mxu0 %v383
    %407 = vmatprep.subr.mxu0 0.0
    %408 = vmatpush1.msra.mxu0 %v384
    %409 = vmatprep.subr.mxu0 0.0
    %410 = vmatpush1.msra.mxu0 %v385
    %411 = vmatprep.subr.mxu0 0.0
    %412 = vmatpush1.msra.mxu0 %v386
    %413 = vmatprep.subr.mxu0 0.0
    %414 = vmatpush1.msra.mxu0 %v387
    %415 = vmatprep.subr.mxu0 0.0
    %416 = vmatpush1.msra.mxu0 0.0
    %417 = vmatprep.subr.mxu0 0.0
    %418 = vmatpush1.msra.mxu0 0.0
    %419 = vmatprep.subr.mxu0 0.0
    %420 = vmatpush1.msra.mxu0 0.0
    %421 = vmatprep.subr.mxu0 0.0
    %422 = vmatpush1.msra.mxu0 0.0
    %423 = vmatprep.subr.mxu0 0.0
    %424 = vmatpush1.msra.mxu0 0.0
    %425 = vmatprep.subr.mxu0 0.0
    %426 = vmatpush1.msra.mxu0 0.0
    %427 = vmatprep.subr.mxu0 0.0
    %428 = vmatpush1.msra.mxu0 0.0
    %429 = vmatprep.subr.mxu0 0.0
    %430 = vmatpush1.msra.mxu0 0.0
    %431 = vmatprep.subr.mxu0 0.0
    %432 = vmatpush1.msra.mxu0 0.0
    %433 = vmatprep.subr.mxu0 0.0
    %434 = vmatpush1.msra.mxu0 0.0
    %435 = vmatprep.subr.mxu0 0.0
    %436 = vmatpush1.msra.mxu0 0.0
    %437 = vmatprep.subr.mxu0 0.0
    %438 = vmatpush1.msra.mxu0 0.0
    %439 = vmatprep.subr.mxu0 0.0
    %440 = vmatpush1.msra.mxu0 0.0
    %441 = vmatprep.subr.mxu0 0.0
    %442 = vmatpush1.msra.mxu0 0.0
    %443 = vmatprep.subr.mxu0 0.0
    %444 = vmatpush1.msra.mxu0 0.0
    %445 = vmatprep.subr.mxu0 0.0
    %446 = vmatpush1.msra.mxu0 0.0
    %447 = vmatprep.subr.mxu0 0.0
    %448 = vmatpush1.msra.mxu0 0.0
    %449 = vmatprep.subr.mxu0 0.0
    %450 = vmatpush1.msra.mxu0 0.0
    %451 = vmatprep.subr.mxu0 0.0
    %452 = vmatpush1.msra.mxu0 0.0
    %453 = vmatprep.subr.mxu0 0.0
    %454 = vmatpush1.msra.mxu0 0.0
    %455 = vmatprep.subr.mxu0 0.0
    %456 = vmatpush1.msra.mxu0 0.0
    %457 = vmatprep.subr.mxu0 0.0
    %458 = vmatpush1.msra.mxu0 0.0
    %459 = vmatprep.subr.mxu0 0.0
    %460 = vmatpush1.msra.mxu0 0.0
    %461 = vmatprep.subr.mxu0 0.0
    %462 = vmatpush1.msra.mxu0 0.0
    %463 = vmatprep.mubr.f32.mxu0 0.0
    %464 = vmatmul.mubr.f32.gmra.mrb[0].mxu0 %v397
    %v465 = vpop.f32.mrb[0].mxu0
    %v466 = vadd.f32 %v393, %v465
    %v467 = vpop.f32.mrb[0].mxu0
    %468 = vdwg.mxu0
    %v469 = vmax.f32 %v466, 0.0
    %v470 = vld [vmem:[%s4] sm:$0xf]
    %v471 = vld [vmem:[%s5] sm:$0x1]
    %v473 = vlaneseq
    %v474 = vshrl.u32 %v473, 7
    %v475 = vsub.s32 0, %v474
    %v476 = vrot.slane %v471, %v475
    %vm478 = vcmask 31744
    %v480 = vsel %vm478, %v469, 0
    %vm482 = vcmask 1043456
    %v484 = vsel %vm482, %v470, 0
    %486 = vmatprep.subr.mxu0 0.0
    %487 = vmatpush1.msra.mxu0 %v484
    %488 = vmatprep.subr.mxu0 0.0
    %489 = vmatpush1.msra.mxu0 0.0
    %490 = vmatprep.subr.mxu0 0.0
    %491 = vmatpush1.msra.mxu0 0.0
    %492 = vmatprep.subr.mxu0 0.0
    %493 = vmatpush1.msra.mxu0 0.0
    %494 = vmatprep.subr.mxu0 0.0
    %495 = vmatpush1.msra.mxu0 0.0
    %496 = vmatprep.subr.mxu0 0.0
    %497 = vmatpush1.msra.mxu0 0.0
    %498 = vmatprep.subr.mxu0 0.0
    %499 = vmatpush1.msra.mxu0 0.0
    %500 = vmatprep.subr.mxu0 0.0
    %501 = vmatpush1.msra.mxu0 0.0
    %502 = vmatprep.subr.mxu0 0.0
    %503 = vmatpush1.msra.mxu0 0.0
    %504 = vmatprep.subr.mxu0 0.0
    %505 = vmatpush1.msra.mxu0 0.0
    %506 = vmatprep.subr.mxu0 0.0
    %507 = vmatpush1.msra.mxu0 0.0
    %508 = vmatprep.subr.mxu0 0.0
    %509 = vmatpush1.msra.mxu0 0.0
    %510 = vmatprep.subr.mxu0 0.0
    %511 = vmatpush1.msra.mxu0 0.0
    %512 = vmatprep.subr.mxu0 0.0
    %513 = vmatpush1.msra.mxu0 0.0
    %514 = vmatprep.subr.mxu0 0.0
    %515 = vmatpush1.msra.mxu0 0.0
    %516 = vmatprep.subr.mxu0 0.0
    %517 = vmatpush1.msra.mxu0 0.0
    %518 = vmatprep.subr.mxu0 0.0
    %519 = vmatpush1.msra.mxu0 0.0
    %520 = vmatprep.subr.mxu0 0.0
    %521 = vmatpush1.msra.mxu0 0.0
    %522 = vmatprep.subr.mxu0 0.0
    %523 = vmatpush1.msra.mxu0 0.0
    %524 = vmatprep.subr.mxu0 0.0
    %525 = vmatpush1.msra.mxu0 0.0
    %526 = vmatprep.subr.mxu0 0.0
    %527 = vmatpush1.msra.mxu0 0.0
    %528 = vmatprep.subr.mxu0 0.0
    %529 = vmatpush1.msra.mxu0 0.0
    %530 = vmatprep.subr.mxu0 0.0
    %531 = vmatpush1.msra.mxu0 0.0
    %532 = vmatprep.subr.mxu0 0.0
    %533 = vmatpush1.msra.mxu0 0.0
    %534 = vmatprep.subr.mxu0 0.0
    %535 = vmatpush1.msra.mxu0 0.0
    %536 = vmatprep.subr.mxu0 0.0
    %537 = vmatpush1.msra.mxu0 0.0
    %538 = vmatprep.subr.mxu0 0.0
    %539 = vmatpush1.msra.mxu0 0.0
    %540 = vmatprep.subr.mxu0 0.0
    %541 = vmatpush1.msra.mxu0 0.0
    %542 = vmatprep.subr.mxu0 0.0
    %543 = vmatpush1.msra.mxu0 0.0
    %544 = vmatprep.subr.mxu0 0.0
    %545 = vmatpush1.msra.mxu0 0.0
    %546 = vmatprep.subr.mxu0 0.0
    %547 = vmatpush1.msra.mxu0 0.0
    %548 = vmatprep.subr.mxu0 0.0
    %549 = vmatpush1.msra.mxu0 0.0
    %550 = vmatprep.mubr.f32.mxu0 0.0
    %551 = vmatmul.mubr.f32.gmra.mrb[0].mxu0 %v480
    %v552 = vpop.f32.mrb[0].mxu0
    %v553 = vadd.f32 %v476, %v552
    %v554 = vpop.f32.mrb[0].mxu0
    %555 = vdwg.mxu0
    %v557 = vrot.slane %v553, 2
    %v559 = vadd.f32 %v553, %v557
    %v560 = vxor.u32 %v559, 2147483648
    %v561 = vmul.f32 %v560, 1.442695
    %v562 = vpow.pop %v561
    %v563 = vadd.f32 %v562, 1.0
    %v564 = vrcp.pop %v563
    %v565 = vmul.f32 1.0, %v564
    %vm566 = vcmask 517120
    %567 = vst.msk [vmem:[#allocation2] sm:$0x3] %vm566, %v565
    // Predicated region
    $region26: #{tpu_custom_call.1} parent=1 // pred_check
      _
    $region27: #{tpu_custom_call.1} parent=1 // pred_check_branch
      %569 = sbr.rel (0) target = $region29
    $region28: #{tpu_custom_call.1} parent=1 // pred_region
      %s571 = ssub.s32 32, 32
      %572 = vsyncadd [#allocation3], %s571
      %s574 = sshll.u32 [#allocation2], 4
      %s575 = int_to_ptr.vmem [resolvable:$true] %s574
      %577 = dma.vmem_to_hbm [thread:$0]  %s575, 32, %s6, [#allocation3]
    $region29: #{tpu_custom_call.1} parent=1 // pred_fallthru
      _
    // Predicated region
    $region30: #{tpu_custom_call.1} parent=1 // pred_check
      _
    $region31: #{tpu_custom_call.1} parent=1 // pred_check_branch
      %579 = sbr.rel (0) target = $region33
    $region32: #{tpu_custom_call.1} parent=1 // pred_region
      %580 = dma.done [#allocation3], 32
    $region33: #{tpu_custom_call.1} parent=1 // pred_fallthru
      _
    %581 = vsyncpa [#allocation3], 1

</llo_original>
